<compile_context>
chip_gen: v7x
topology: tpu7x:2x2x1
jax: 0.10.0
libtpu: 0.0.40
codegen_flags: <defaults>
</compile_context>

<pallas_src>
import jax
import jax.numpy as jnp
from jax import lax
from jax.experimental import pallas as pl
from jax.experimental.pallas import tpu as pltpu


def make_conv2d_block_kernel(H, W, Cin, Cout, K, pool, B):
    """Returns a pallas_call wrapper for one fused conv+bn+relu+maxpool block.

    Kernel inputs (per grid step, B images):
      x_ref : (KK*Cin, B*H*W)  bf16   im2col'd activations, lanes = flat (n, h, w)
      w_ref : (Cout, KK*Cin)   bf16   conv weights with BN scale folded in
      b_ref : (Cout, 1)        f32    conv bias + BN bias folded
    Output:
      o_ref : (B*Ho*Wo, Cout)  f32    pooled activations (rows = flat (n, ho, wo))
    """
    HW = H * W
    KKC = K * K * Cin
    Ho, Wo = H // pool, W // pool
    HoWo = Ho * Wo
    BHW = B * HW
    # rows h <= H - pool are the only ones a pooling window can start at
    Lv = BHW - (pool - 1) * W

    def kernel(x_ref, w_ref, b_ref, o_ref, ys_ref, hm_ref):
        # (1) conv as a single MXU matmul; output lane dim = B*H*W (fully lane-dense).
        y = jnp.dot(w_ref[...], x_ref[...], preferred_element_type=jnp.float32)
        # (2) fused (conv bias + BatchNorm) bias add + ReLU; the BN scale is already
        #     folded into the weights.  Still lane-dense (Cout, B*H*W) f32.
        y = jnp.maximum(y + b_ref[...], 0.0)

        # (3) MaxPool2d(pool) on the VPU.
        #     One aligned 2-D transpose (8, B*HW) -> (B*HW, 8) puts the flat spatial
        #     axis on sublanes so the pooling gathers are plain (strided) row reads.
        ys_ref[...] = jnp.transpose(y, (1, 0))                   # (B*HW, Cout)

        #     pool over h: running max of row windows shifted by r*W (unit stride).
        vm = ys_ref[pl.ds(0, Lv), :]
        for r in range(1, pool):
            vm = jnp.maximum(vm, ys_ref[pl.ds(r * W, Lv), :])
        hm_ref[pl.ds(0, Lv), :] = vm                             # tail rows unused

        #     pool over w + compact: for each output row (image, ho) gather the Wo
        #     window anchors (sublane stride = pool) and max over the w offsets.
        for bb in range(B):
            for ho in range(Ho):
                src = bb * HW + ho * pool * W
                dst = (bb * Ho + ho) * Wo
                blk = hm_ref[pl.ds(src, Wo, stride=pool), :]     # (Wo, Cout)
                for s in range(1, pool):
                    blk = jnp.maximum(
                        blk, hm_ref[pl.ds(src + s, Wo, stride=pool), :])
                o_ref[pl.ds(dst, Wo), :] = blk

    def call(x_t, wk, bias):
        n_total = x_t.shape[1] // HW
        assert n_total % B == 0
        grid = (n_total // B,)
        return pl.pallas_call(
            kernel,
            out_shape=jax.ShapeDtypeStruct((n_total * HoWo, Cout), jnp.float32),
            grid=grid,
            in_specs=[
                # activations: block i = images [i*B, (i+1)*B)
                pl.BlockSpec((KKC, B * HW), lambda i: (0, i)),
                # folded weights / bias are grid-invariant (same block every step,
                # so the pipeline does not re-fetch them between steps)
                pl.BlockSpec((Cout, KKC), lambda i: (0, 0)),
                pl.BlockSpec((Cout, 1), lambda i: (0, 0)),
            ],
            out_specs=pl.BlockSpec((B * HoWo, Cout), lambda i: (i, 0)),
            scratch_shapes=[
                pltpu.VMEM((BHW, Cout), jnp.float32),   # ys: transposed activations
                pltpu.VMEM((BHW, Cout), jnp.float32),   # hm: h-pooled activations
            ],
            compiler_params=pltpu.CompilerParams(
                dimension_semantics=("parallel",)),     # batch blocks are independent
        )(x_t, wk, bias)

    return call


def conv2d_block_forward(x_nchw, w, b, gamma, beta, r_mean, r_var,
                         pool=2, eps=1e-5, batch_block=None):
    """NCHW wrapper matching the PyTorch CONV2dblock forward (inference)."""
    N, Cin, H, W = x_nchw.shape
    Cout, _, K, _ = w.shape
    assert K % 2 == 1, "padding='same' reproduced only for odd kernel sizes"
    assert H % pool == 0 and W % pool == 0
    pad = K // 2
    Ho, Wo = H // pool, W // pool
    HW, KK = H * W, K * K

    if batch_block is None:
        batch_block = N            # tiny problem: fold the whole batch into one step
    assert N % batch_block == 0

    # ---- fold BatchNorm (running stats) + conv bias; fold the scale into W ----
    scale = gamma / jnp.sqrt(r_var + eps)                           # (Cout,)
    bias = (scale * (b - r_mean) + beta).astype(jnp.float32).reshape(Cout, 1)
    wk = jnp.transpose(w, (0, 2, 3, 1)).reshape(Cout, KK * Cin)     # (Cout, kh*kw*cin)
    wk = (wk * scale[:, None]).astype(jnp.bfloat16)                 # bf16 MXU weights

    # ---- im2col, transposed & lane-dense: rows = (kh, kw, cin), cols = (n, h, w) ----
    x = jnp.transpose(x_nchw, (0, 2, 3, 1))                         # NHWC
    xp = jnp.pad(x, ((0, 0), (pad, pad), (pad, pad), (0, 0)))
    taps = [xp[:, kh:kh + H, kw:kw + W, :] for kh in range(K) for kw in range(K)]
    xc = jnp.stack(taps, axis=0)                                    # (KK, N, H, W, Cin)
    xc = jnp.transpose(xc, (0, 4, 1, 2, 3))                         # (KK, Cin, N, H, W)
    x_t = xc.reshape(KK * Cin, N * HW).astype(jnp.bfloat16)

    call = make_conv2d_block_kernel(H, W, Cin, Cout, K, pool, batch_block)
    out = call(x_t, wk, bias)                                       # (N*HoWo, Cout) f32
    out = out.reshape(N, Ho, Wo, Cout)
    return jnp.transpose(out, (0, 3, 1, 2))                         # NCHW


def reference_forward(x, w, b, gamma, beta, r_mean, r_var, pool=2, eps=1e-5):
    y = lax.conv_general_dilated(
        x, w, window_strides=(1, 1), padding="SAME",
        dimension_numbers=("NCHW", "OIHW", "NCHW"))
    y = y + b[None, :, None, None]
    y = gamma[None, :, None, None] * (y - r_mean[None, :, None, None]) \
        / jnp.sqrt(r_var + eps)[None, :, None, None] + beta[None, :, None, None]
    y = jnp.maximum(y, 0.0)
    y = lax.reduce_window(y, -jnp.inf, lax.max,
                          (1, 1, pool, pool), (1, 1, pool, pool), "VALID")
    return y


if __name__ == "__main__":
    N, Cin, Cout, H, W, K, pool = 2, 4, 8, 16, 16, 3, 2

    key = jax.random.PRNGKey(0)
    k1, k2, k3, k4, k5, k6, k7 = jax.random.split(key, 7)
    x = jax.random.normal(k1, (N, Cin, H, W), jnp.float32)
    w = 0.1 * jax.random.normal(k2, (Cout, Cin, K, K), jnp.float32)
    b = 0.1 * jax.random.normal(k3, (Cout,), jnp.float32)
    gamma = 1.0 + 0.1 * jax.random.normal(k4, (Cout,), jnp.float32)
    beta = 0.1 * jax.random.normal(k5, (Cout,), jnp.float32)
    r_mean = 0.1 * jax.random.normal(k6, (Cout,), jnp.float32)
    r_var = 1.0 + 0.1 * jnp.abs(jax.random.normal(k7, (Cout,), jnp.float32))

    out = conv2d_block_forward(x, w, b, gamma, beta, r_mean, r_var, pool=pool)
    out = jax.block_until_ready(out)

    ref = reference_forward(x, w, b, gamma, beta, r_mean, r_var, pool=pool)
    ref = jax.block_until_ready(ref)

    assert out.shape == (N, Cout, H // pool, W // pool), out.shape
    # bf16 MXU inputs with f32 accumulation -> loosened tolerance (see perf review)
    if not bool(jnp.allclose(out, ref, rtol=2e-2, atol=2e-2)):
        raise AssertionError("Pallas kernel output does not match reference")

    print("KERNEL_OK")
</pallas_src>

<mosaic_0001>
module attributes {stable_mosaic.version = 11 : i64} {
  func.func @kernel(%arg0: i32, %arg1: memref<36x512xbf16, #tpu.memory_space<vmem>>, %arg2: memref<8x36xbf16, #tpu.memory_space<vmem>>, %arg3: memref<8x1xf32, #tpu.memory_space<vmem>>, %arg4: memref<128x8xf32, #tpu.memory_space<vmem>>, %arg5: memref<512x8xf32, #tpu.memory_space<vmem>>, %arg6: memref<512x8xf32, #tpu.memory_space<vmem>>) attributes {dimension_semantics = [#tpu.dimension_semantics<parallel>], iteration_bounds = array<i64: 1>, scalar_prefetch = 0 : i64, scratch_operands = 2 : i64, tpu.core_type = #tpu.core_type<tc>, window_params = [{transform_indices = @transform_0, window_bounds = array<i64: 36, 512>}, {pipeline_mode = #tpu.pipeline_mode<synchronous>, transform_indices = @transform_1, window_bounds = array<i64: 8, 36>}, {pipeline_mode = #tpu.pipeline_mode<synchronous>, transform_indices = @transform_2, window_bounds = array<i64: 8, 1>}, {transform_indices = @transform_3, window_bounds = array<i64: 128, 8>}]} {
    %c0 = arith.constant 0 : index
    %c0_0 = arith.constant 0 : index
    %0 = vector.load %arg2[%c0, %c0_0] : memref<8x36xbf16, #tpu.memory_space<vmem>>, vector<8x36xbf16>
    %c0_1 = arith.constant 0 : index
    %c0_2 = arith.constant 0 : index
    %1 = vector.load %arg1[%c0_1, %c0_2] : memref<36x512xbf16, #tpu.memory_space<vmem>>, vector<36x512xbf16>
    %cst = arith.constant dense<0.000000e+00> : vector<8x512xf32>
    %2 = tpu.matmul %0, %1, %cst {dimension_numbers = #tpu.dot_dimension_numbers<[1], [0], [0], [1], [0, 0, 1, 1], [], []>} : vector<8x36xbf16>, vector<36x512xbf16>, vector<8x512xf32> -> vector<8x512xf32>
    %c0_3 = arith.constant 0 : index
    %c0_4 = arith.constant 0 : index
    %3 = vector.load %arg3[%c0_3, %c0_4] : memref<8x1xf32, #tpu.memory_space<vmem>>, vector<8x1xf32>
    %4 = vector.broadcast %3 : vector<8x1xf32> to vector<8x512xf32>
    %5 = arith.addf %2, %4 : vector<8x512xf32>
    %cst_5 = arith.constant 0.000000e+00 : f32
    %6 = vector.broadcast %cst_5 : f32 to vector<8x512xf32>
    %7 = arith.maximumf %5, %6 : vector<8x512xf32>
    %8 = tpu.transpose %7, [1, 0] : vector<8x512xf32> -> vector<512x8xf32>
    %c0_6 = arith.constant 0 : index
    %c0_7 = arith.constant 0 : index
    %9 = vector.load %arg5[%c0_6, %c0_7] : memref<512x8xf32, #tpu.memory_space<vmem>>, vector<512x8xf32>
    tpu.vector_store %arg5[%c0_6, %c0_7], %8 {strides = array<i32>} : memref<512x8xf32, #tpu.memory_space<vmem>>, vector<512x8xf32>,
    %c0_8 = arith.constant 0 : index
    %c0_9 = arith.constant 0 : index
    %10 = vector.load %arg5[%c0_8, %c0_9] : memref<512x8xf32, #tpu.memory_space<vmem>>, vector<496x8xf32>
    %c16 = arith.constant 16 : index
    %c0_10 = arith.constant 0 : index
    %11 = vector.load %arg5[%c16, %c0_10] : memref<512x8xf32, #tpu.memory_space<vmem>>, vector<496x8xf32>
    %12 = arith.maximumf %10, %11 : vector<496x8xf32>
    %c0_11 = arith.constant 0 : index
    %c0_12 = arith.constant 0 : index
    %13 = vector.load %arg6[%c0_11, %c0_12] : memref<512x8xf32, #tpu.memory_space<vmem>>, vector<496x8xf32>
    tpu.vector_store %arg6[%c0_11, %c0_12], %12 {strides = array<i32>} : memref<512x8xf32, #tpu.memory_space<vmem>>, vector<496x8xf32>,
    %c0_13 = arith.constant 0 : index
    %c0_14 = arith.constant 0 : index
    %14 = tpu.strided_load %arg6[%c0_13, %c0_14] {strides = array<i32: 2, 1>} : memref<512x8xf32, #tpu.memory_space<vmem>>, vector<8x8xf32>
    %c1 = arith.constant 1 : index
    %c0_15 = arith.constant 0 : index
    %15 = tpu.strided_load %arg6[%c1, %c0_15] {strides = array<i32: 2, 1>} : memref<512x8xf32, #tpu.memory_space<vmem>>, vector<8x8xf32>
    %16 = arith.maximumf %14, %15 : vector<8x8xf32>
    %c0_16 = arith.constant 0 : index
    %c0_17 = arith.constant 0 : index
    %17 = vector.load %arg4[%c0_16, %c0_17] : memref<128x8xf32, #tpu.memory_space<vmem>>, vector<8x8xf32>
    tpu.vector_store %arg4[%c0_16, %c0_17], %16 {strides = array<i32>} : memref<128x8xf32, #tpu.memory_space<vmem>>, vector<8x8xf32>,
    %c32 = arith.constant 32 : index
    %c0_18 = arith.constant 0 : index
    %18 = tpu.strided_load %arg6[%c32, %c0_18] {strides = array<i32: 2, 1>} : memref<512x8xf32, #tpu.memory_space<vmem>>, vector<8x8xf32>
    %c33 = arith.constant 33 : index
    %c0_19 = arith.constant 0 : index
    %19 = tpu.strided_load %arg6[%c33, %c0_19] {strides = array<i32: 2, 1>} : memref<512x8xf32, #tpu.memory_space<vmem>>, vector<8x8xf32>
    %20 = arith.maximumf %18, %19 : vector<8x8xf32>
    %c8 = arith.constant 8 : index
    %c0_20 = arith.constant 0 : index
    %21 = vector.load %arg4[%c8, %c0_20] : memref<128x8xf32, #tpu.memory_space<vmem>>, vector<8x8xf32>
    tpu.vector_store %arg4[%c8, %c0_20], %20 {strides = array<i32>} : memref<128x8xf32, #tpu.memory_space<vmem>>, vector<8x8xf32>,
    %c64 = arith.constant 64 : index
    %c0_21 = arith.constant 0 : index
    %22 = tpu.strided_load %arg6[%c64, %c0_21] {strides = array<i32: 2, 1>} : memref<512x8xf32, #tpu.memory_space<vmem>>, vector<8x8xf32>
    %c65 = arith.constant 65 : index
    %c0_22 = arith.constant 0 : index
    %23 = tpu.strided_load %arg6[%c65, %c0_22] {strides = array<i32: 2, 1>} : memref<512x8xf32, #tpu.memory_space<vmem>>, vector<8x8xf32>
    %24 = arith.maximumf %22, %23 : vector<8x8xf32>
    %c16_23 = arith.constant 16 : index
    %c0_24 = arith.constant 0 : index
    %25 = vector.load %arg4[%c16_23, %c0_24] : memref<128x8xf32, #tpu.memory_space<vmem>>, vector<8x8xf32>
    tpu.vector_store %arg4[%c16_23, %c0_24], %24 {strides = array<i32>} : memref<128x8xf32, #tpu.memory_space<vmem>>, vector<8x8xf32>,
    %c96 = arith.constant 96 : index
    %c0_25 = arith.constant 0 : index
    %26 = tpu.strided_load %arg6[%c96, %c0_25] {strides = array<i32: 2, 1>} : memref<512x8xf32, #tpu.memory_space<vmem>>, vector<8x8xf32>
    %c97 = arith.constant 97 : index
    %c0_26 = arith.constant 0 : index
    %27 = tpu.strided_load %arg6[%c97, %c0_26] {strides = array<i32: 2, 1>} : memref<512x8xf32, #tpu.memory_space<vmem>>, vector<8x8xf32>
    %28 = arith.maximumf %26, %27 : vector<8x8xf32>
    %c24 = arith.constant 24 : index
    %c0_27 = arith.constant 0 : index
    %29 = vector.load %arg4[%c24, %c0_27] : memref<128x8xf32, #tpu.memory_space<vmem>>, vector<8x8xf32>
    tpu.vector_store %arg4[%c24, %c0_27], %28 {strides = array<i32>} : memref<128x8xf32, #tpu.memory_space<vmem>>, vector<8x8xf32>,
    %c128 = arith.constant 128 : index
    %c0_28 = arith.constant 0 : index
    %30 = tpu.strided_load %arg6[%c128, %c0_28] {strides = array<i32: 2, 1>} : memref<512x8xf32, #tpu.memory_space<vmem>>, vector<8x8xf32>
    %c129 = arith.constant 129 : index
    %c0_29 = arith.constant 0 : index
    %31 = tpu.strided_load %arg6[%c129, %c0_29] {strides = array<i32: 2, 1>} : memref<512x8xf32, #tpu.memory_space<vmem>>, vector<8x8xf32>
    %32 = arith.maximumf %30, %31 : vector<8x8xf32>
    %c32_30 = arith.constant 32 : index
    %c0_31 = arith.constant 0 : index
    %33 = vector.load %arg4[%c32_30, %c0_31] : memref<128x8xf32, #tpu.memory_space<vmem>>, vector<8x8xf32>
    tpu.vector_store %arg4[%c32_30, %c0_31], %32 {strides = array<i32>} : memref<128x8xf32, #tpu.memory_space<vmem>>, vector<8x8xf32>,
    %c160 = arith.constant 160 : index
    %c0_32 = arith.constant 0 : index
    %34 = tpu.strided_load %arg6[%c160, %c0_32] {strides = array<i32: 2, 1>} : memref<512x8xf32, #tpu.memory_space<vmem>>, vector<8x8xf32>
    %c161 = arith.constant 161 : index
    %c0_33 = arith.constant 0 : index
    %35 = tpu.strided_load %arg6[%c161, %c0_33] {strides = array<i32: 2, 1>} : memref<512x8xf32, #tpu.memory_space<vmem>>, vector<8x8xf32>
    %36 = arith.maximumf %34, %35 : vector<8x8xf32>
    %c40 = arith.constant 40 : index
    %c0_34 = arith.constant 0 : index
    %37 = vector.load %arg4[%c40, %c0_34] : memref<128x8xf32, #tpu.memory_space<vmem>>, vector<8x8xf32>
    tpu.vector_store %arg4[%c40, %c0_34], %36 {strides = array<i32>} : memref<128x8xf32, #tpu.memory_space<vmem>>, vector<8x8xf32>,
    %c192 = arith.constant 192 : index
    %c0_35 = arith.constant 0 : index
    %38 = tpu.strided_load %arg6[%c192, %c0_35] {strides = array<i32: 2, 1>} : memref<512x8xf32, #tpu.memory_space<vmem>>, vector<8x8xf32>
    %c193 = arith.constant 193 : index
    %c0_36 = arith.constant 0 : index
    %39 = tpu.strided_load %arg6[%c193, %c0_36] {strides = array<i32: 2, 1>} : memref<512x8xf32, #tpu.memory_space<vmem>>, vector<8x8xf32>
    %40 = arith.maximumf %38, %39 : vector<8x8xf32>
    %c48 = arith.constant 48 : index
    %c0_37 = arith.constant 0 : index
    %41 = vector.load %arg4[%c48, %c0_37] : memref<128x8xf32, #tpu.memory_space<vmem>>, vector<8x8xf32>
    tpu.vector_store %arg4[%c48, %c0_37], %40 {strides = array<i32>} : memref<128x8xf32, #tpu.memory_space<vmem>>, vector<8x8xf32>,
    %c224 = arith.constant 224 : index
    %c0_38 = arith.constant 0 : index
    %42 = tpu.strided_load %arg6[%c224, %c0_38] {strides = array<i32: 2, 1>} : memref<512x8xf32, #tpu.memory_space<vmem>>, vector<8x8xf32>
    %c225 = arith.constant 225 : index
    %c0_39 = arith.constant 0 : index
    %43 = tpu.strided_load %arg6[%c225, %c0_39] {strides = array<i32: 2, 1>} : memref<512x8xf32, #tpu.memory_space<vmem>>, vector<8x8xf32>
    %44 = arith.maximumf %42, %43 : vector<8x8xf32>
    %c56 = arith.constant 56 : index
    %c0_40 = arith.constant 0 : index
    %45 = vector.load %arg4[%c56, %c0_40] : memref<128x8xf32, #tpu.memory_space<vmem>>, vector<8x8xf32>
    tpu.vector_store %arg4[%c56, %c0_40], %44 {strides = array<i32>} : memref<128x8xf32, #tpu.memory_space<vmem>>, vector<8x8xf32>,
    %c256 = arith.constant 256 : index
    %c0_41 = arith.constant 0 : index
    %46 = tpu.strided_load %arg6[%c256, %c0_41] {strides = array<i32: 2, 1>} : memref<512x8xf32, #tpu.memory_space<vmem>>, vector<8x8xf32>
    %c257 = arith.constant 257 : index
    %c0_42 = arith.constant 0 : index
    %47 = tpu.strided_load %arg6[%c257, %c0_42] {strides = array<i32: 2, 1>} : memref<512x8xf32, #tpu.memory_space<vmem>>, vector<8x8xf32>
    %48 = arith.maximumf %46, %47 : vector<8x8xf32>
    %c64_43 = arith.constant 64 : index
    %c0_44 = arith.constant 0 : index
    %49 = vector.load %arg4[%c64_43, %c0_44] : memref<128x8xf32, #tpu.memory_space<vmem>>, vector<8x8xf32>
    tpu.vector_store %arg4[%c64_43, %c0_44], %48 {strides = array<i32>} : memref<128x8xf32, #tpu.memory_space<vmem>>, vector<8x8xf32>,
    %c288 = arith.constant 288 : index
    %c0_45 = arith.constant 0 : index
    %50 = tpu.strided_load %arg6[%c288, %c0_45] {strides = array<i32: 2, 1>} : memref<512x8xf32, #tpu.memory_space<vmem>>, vector<8x8xf32>
    %c289 = arith.constant 289 : index
    %c0_46 = arith.constant 0 : index
    %51 = tpu.strided_load %arg6[%c289, %c0_46] {strides = array<i32: 2, 1>} : memref<512x8xf32, #tpu.memory_space<vmem>>, vector<8x8xf32>
    %52 = arith.maximumf %50, %51 : vector<8x8xf32>
    %c72 = arith.constant 72 : index
    %c0_47 = arith.constant 0 : index
    %53 = vector.load %arg4[%c72, %c0_47] : memref<128x8xf32, #tpu.memory_space<vmem>>, vector<8x8xf32>
    tpu.vector_store %arg4[%c72, %c0_47], %52 {strides = array<i32>} : memref<128x8xf32, #tpu.memory_space<vmem>>, vector<8x8xf32>,
    %c320 = arith.constant 320 : index
    %c0_48 = arith.constant 0 : index
    %54 = tpu.strided_load %arg6[%c320, %c0_48] {strides = array<i32: 2, 1>} : memref<512x8xf32, #tpu.memory_space<vmem>>, vector<8x8xf32>
    %c321 = arith.constant 321 : index
    %c0_49 = arith.constant 0 : index
    %55 = tpu.strided_load %arg6[%c321, %c0_49] {strides = array<i32: 2, 1>} : memref<512x8xf32, #tpu.memory_space<vmem>>, vector<8x8xf32>
    %56 = arith.maximumf %54, %55 : vector<8x8xf32>
    %c80 = arith.constant 80 : index
    %c0_50 = arith.constant 0 : index
    %57 = vector.load %arg4[%c80, %c0_50] : memref<128x8xf32, #tpu.memory_space<vmem>>, vector<8x8xf32>
    tpu.vector_store %arg4[%c80, %c0_50], %56 {strides = array<i32>} : memref<128x8xf32, #tpu.memory_space<vmem>>, vector<8x8xf32>,
    %c352 = arith.constant 352 : index
    %c0_51 = arith.constant 0 : index
    %58 = tpu.strided_load %arg6[%c352, %c0_51] {strides = array<i32: 2, 1>} : memref<512x8xf32, #tpu.memory_space<vmem>>, vector<8x8xf32>
    %c353 = arith.constant 353 : index
    %c0_52 = arith.constant 0 : index
    %59 = tpu.strided_load %arg6[%c353, %c0_52] {strides = array<i32: 2, 1>} : memref<512x8xf32, #tpu.memory_space<vmem>>, vector<8x8xf32>
    %60 = arith.maximumf %58, %59 : vector<8x8xf32>
    %c88 = arith.constant 88 : index
    %c0_53 = arith.constant 0 : index
    %61 = vector.load %arg4[%c88, %c0_53] : memref<128x8xf32, #tpu.memory_space<vmem>>, vector<8x8xf32>
    tpu.vector_store %arg4[%c88, %c0_53], %60 {strides = array<i32>} : memref<128x8xf32, #tpu.memory_space<vmem>>, vector<8x8xf32>,
    %c384 = arith.constant 384 : index
    %c0_54 = arith.constant 0 : index
    %62 = tpu.strided_load %arg6[%c384, %c0_54] {strides = array<i32: 2, 1>} : memref<512x8xf32, #tpu.memory_space<vmem>>, vector<8x8xf32>
    %c385 = arith.constant 385 : index
    %c0_55 = arith.constant 0 : index
    %63 = tpu.strided_load %arg6[%c385, %c0_55] {strides = array<i32: 2, 1>} : memref<512x8xf32, #tpu.memory_space<vmem>>, vector<8x8xf32>
    %64 = arith.maximumf %62, %63 : vector<8x8xf32>
    %c96_56 = arith.constant 96 : index
    %c0_57 = arith.constant 0 : index
    %65 = vector.load %arg4[%c96_56, %c0_57] : memref<128x8xf32, #tpu.memory_space<vmem>>, vector<8x8xf32>
    tpu.vector_store %arg4[%c96_56, %c0_57], %64 {strides = array<i32>} : memref<128x8xf32, #tpu.memory_space<vmem>>, vector<8x8xf32>,
    %c416 = arith.constant 416 : index
    %c0_58 = arith.constant 0 : index
    %66 = tpu.strided_load %arg6[%c416, %c0_58] {strides = array<i32: 2, 1>} : memref<512x8xf32, #tpu.memory_space<vmem>>, vector<8x8xf32>
    %c417 = arith.constant 417 : index
    %c0_59 = arith.constant 0 : index
    %67 = tpu.strided_load %arg6[%c417, %c0_59] {strides = array<i32: 2, 1>} : memref<512x8xf32, #tpu.memory_space<vmem>>, vector<8x8xf32>
    %68 = arith.maximumf %66, %67 : vector<8x8xf32>
    %c104 = arith.constant 104 : index
    %c0_60 = arith.constant 0 : index
    %69 = vector.load %arg4[%c104, %c0_60] : memref<128x8xf32, #tpu.memory_space<vmem>>, vector<8x8xf32>
    tpu.vector_store %arg4[%c104, %c0_60], %68 {strides = array<i32>} : memref<128x8xf32, #tpu.memory_space<vmem>>, vector<8x8xf32>,
    %c448 = arith.constant 448 : index
    %c0_61 = arith.constant 0 : index
    %70 = tpu.strided_load %arg6[%c448, %c0_61] {strides = array<i32: 2, 1>} : memref<512x8xf32, #tpu.memory_space<vmem>>, vector<8x8xf32>
    %c449 = arith.constant 449 : index
    %c0_62 = arith.constant 0 : index
    %71 = tpu.strided_load %arg6[%c449, %c0_62] {strides = array<i32: 2, 1>} : memref<512x8xf32, #tpu.memory_space<vmem>>, vector<8x8xf32>
    %72 = arith.maximumf %70, %71 : vector<8x8xf32>
    %c112 = arith.constant 112 : index
    %c0_63 = arith.constant 0 : index
    %73 = vector.load %arg4[%c112, %c0_63] : memref<128x8xf32, #tpu.memory_space<vmem>>, vector<8x8xf32>
    tpu.vector_store %arg4[%c112, %c0_63], %72 {strides = array<i32>} : memref<128x8xf32, #tpu.memory_space<vmem>>, vector<8x8xf32>,
    %c480 = arith.constant 480 : index
    %c0_64 = arith.constant 0 : index
    %74 = tpu.strided_load %arg6[%c480, %c0_64] {strides = array<i32: 2, 1>} : memref<512x8xf32, #tpu.memory_space<vmem>>, vector<8x8xf32>
    %c481 = arith.constant 481 : index
    %c0_65 = arith.constant 0 : index
    %75 = tpu.strided_load %arg6[%c481, %c0_65] {strides = array<i32: 2, 1>} : memref<512x8xf32, #tpu.memory_space<vmem>>, vector<8x8xf32>
    %76 = arith.maximumf %74, %75 : vector<8x8xf32>
    %c120 = arith.constant 120 : index
    %c0_66 = arith.constant 0 : index
    %77 = vector.load %arg4[%c120, %c0_66] : memref<128x8xf32, #tpu.memory_space<vmem>>, vector<8x8xf32>
    tpu.vector_store %arg4[%c120, %c0_66], %76 {strides = array<i32>} : memref<128x8xf32, #tpu.memory_space<vmem>>, vector<8x8xf32>,
    return
  }
  func.func @transform_0(%arg0: i32) -> (i32, i32) {
    %c0_i32 = arith.constant 0 : i32
    %c0_i32_0 = arith.constant 0 : i32
    return %c0_i32, %arg0 : i32, i32
  }
  func.func @transform_1(%arg0: i32) -> (i32, i32) {
    %c0_i32 = arith.constant 0 : i32
    %c0_i32_0 = arith.constant 0 : i32
    %c0_i32_1 = arith.constant 0 : i32
    return %c0_i32, %c0_i32_0 : i32, i32
  }
  func.func @transform_2(%arg0: i32) -> (i32, i32) {
    %c0_i32 = arith.constant 0 : i32
    %c0_i32_0 = arith.constant 0 : i32
    %c0_i32_1 = arith.constant 0 : i32
    return %c0_i32, %c0_i32_0 : i32, i32
  }
  func.func @transform_3(%arg0: i32) -> (i32, i32) {
    %c0_i32 = arith.constant 0 : i32
    %c0_i32_0 = arith.constant 0 : i32
    return %arg0, %c0_i32 : i32, i32
  }
}

</mosaic_0001>

<llo_original>
// kernel: tpu_custom_call.1
$region0: #{tpu_custom_call.1}
  #allocation0 [shape = 'u32[]', space=smem, size = 0x4, offset = 0x4, fixed_abs, tag = 'smem constant byte address 0x4 - core index']
  #allocation1 [shape = 'u32[144,128]{1,0:T(1,128)}', space=vmem, size = 0x12000, scoped, tag = 'internal scratch']
  #allocation2 [shape = 'f32[512,8]{1,0:T(8,128)}', space=vmem, size = 0x40000, scoped, tag = 'scratch operand']
  #allocation3 [shape = 'f32[512,8]{1,0:T(8,128)}', space=vmem, size = 0x40000, scoped, tag = 'scratch operand']
  %s0 = inlined_call_operand.hbm [shape: bf16[36,512], index: 0, kind: input, shape index: {}]
  %s1 = inlined_call_operand.vmem [shape: bf16[8,36], index: 1, kind: input, shape index: {}]
  %s2 = inlined_call_operand.vmem [shape: f32[8,1], index: 2, kind: input, shape index: {}]
  %s3 = inlined_call_operand.vmem [shape: f32[128,8], index: 3, kind: output, shape index: {}]
  %s4 = sld [smem:[#allocation0]]
  $region26: #{tpu_custom_call.1} parent=0
    _
  %s6 = ssub.s32 1, %s4
  %s7 = scalar_select 0, %s6, %s4
  $region1: #{tpu_custom_call.1} parent=0
    #allocation4 [shape = 'u8[40960]{0}', space=vmem, size = 0xa000, scoped, tag = 'input window, operand 0, single buffered']
    #allocation5 [shape = 's32[1]{0}', space=sflag, size = 0x4, scoped, tag = 'scoped memory for tpu_custom_call.1']
    %8 = vsyncpa [#allocation5], 0
    // Predicated region
    $region2: #{tpu_custom_call.1} parent=1 // pred_check
      _
    $region3: #{tpu_custom_call.1} parent=1 // pred_check_branch
      %10 = sbr.rel (0) target = $region5
    $region4: #{tpu_custom_call.1} parent=1 // pred_region
      %s12 = ssub.s32 1280, 1280
      %13 = vsyncadd [#allocation5], %s12
      %s14 = sshll.u32 [#allocation4], 4
      %s15 = int_to_ptr.vmem [resolvable:$true] %s14
      %20 = dma.hbm_to_vmem [thread:$0]  %s0, 1280, %s15, [#allocation5], 256, 256, 16
    $region5: #{tpu_custom_call.1} parent=1 // pred_fallthru
      _
    // Predicated region
    $region6: #{tpu_custom_call.1} parent=1 // pred_check
      _
    $region7: #{tpu_custom_call.1} parent=1 // pred_check_branch
      %22 = sbr.rel (0) target = $region9
    $region8: #{tpu_custom_call.1} parent=1 // pred_region
      _
    $region9: #{tpu_custom_call.1} parent=1 // pred_fallthru
      _
    // Predicated region
    $region10: #{tpu_custom_call.1} parent=1 // pred_check
      _
    $region11: #{tpu_custom_call.1} parent=1 // pred_check_branch
      %24 = sbr.rel (0) target = $region13
    $region12: #{tpu_custom_call.1} parent=1 // pred_region
      _
    $region13: #{tpu_custom_call.1} parent=1 // pred_fallthru
      _
    // Predicated region
    $region14: #{tpu_custom_call.1} parent=1 // pred_check
      _
    $region15: #{tpu_custom_call.1} parent=1 // pred_check_branch
      %26 = sbr.rel (0) target = $region17
    $region16: #{tpu_custom_call.1} parent=1 // pred_region
      %27 = dma.done [#allocation5], 1280
    $region17: #{tpu_custom_call.1} parent=1 // pred_fallthru
      _
    %v29 = vld [vmem:[%s1] sm:$0xf]
    %v30 = vld [vmem:[#allocation4] sm:$0xff]
    %v31 = vld [vmem:[#allocation4 + $0x8] sm:$0xff]
    %v32 = vld [vmem:[#allocation4 + $0x10] sm:$0xff]
    %v33 = vld [vmem:[#allocation4 + $0x18] sm:$0xff]
    %v34 = vld [vmem:[#allocation4 + $0x20] sm:$0xff]
    %v35 = vld [vmem:[#allocation4 + $0x28] sm:$0xff]
    %v36 = vld [vmem:[#allocation4 + $0x30] sm:$0xff]
    %v37 = vld [vmem:[#allocation4 + $0x38] sm:$0xff]
    %v38 = vld [vmem:[#allocation4 + $0x40] sm:$0x33]
    %v39 = vld [vmem:[#allocation4 + $0x48] sm:$0x33]
    %v40 = vld [vmem:[%s2] sm:$0xff]
    %42 = vset.pattern.permute.xlu0 0
    %43 = vperm.xlu0 %42, %v40
    %v44 = vpop.permute.xlu0 %43
    %v56 = vunpack.c.l.b16 %v30
    %v57 = vunpack.c.h.b16 %v30
    %v58 = vunpack.c.l.b16 %v31
    %v59 = vunpack.c.h.b16 %v31
    %v60 = vunpack.c.l.b16 %v32
    %v61 = vunpack.c.h.b16 %v32
    %v62 = vunpack.c.l.b16 %v33
    %v63 = vunpack.c.h.b16 %v33
    %v64 = vunpack.c.l.b16 %v34
    %v65 = vunpack.c.h.b16 %v34
    %v66 = vunpack.c.l.b16 %v35
    %v67 = vunpack.c.h.b16 %v35
    %v68 = vunpack.c.l.b16 %v36
    %v69 = vunpack.c.h.b16 %v36
    %v70 = vunpack.c.l.b16 %v37
    %v71 = vunpack.c.h.b16 %v37
    %v72 = vunpack.c.l.b16 %v38
    %v73 = vunpack.c.h.b16 %v38
    %v74 = vunpack.c.l.b16 %v39
    %v75 = vunpack.c.h.b16 %v39
    %v76 = vpack.c.b16 %v60, %v56
    %v77 = vpack.c.b16 %v61, %v57
    %v78 = vpack.c.b16 %v62, %v58
    %v79 = vpack.c.b16 %v63, %v59
    %v80 = vpack.c.b16 %v68, %v64
    %v81 = vpack.c.b16 %v69, %v65
    %v82 = vpack.c.b16 %v70, %v66
    %v83 = vpack.c.b16 %v71, %v67
    %v84 = vpack.c.b16 %v72, %v72
    %v85 = vpack.c.b16 %v73, %v73
    %v86 = vpack.c.b16 %v74, %v74
    %v87 = vpack.c.b16 %v75, %v75
    %vm96 = vcmask 293888
    %v98 = vsel %vm96, %v29, 0
    %vm100 = vcmask 1041408
    %v102 = vsel %vm100, %v84, 0
    %v105 = vsel %vm100, %v85, 0
    %v108 = vsel %vm100, %v86, 0
    %v111 = vsel %vm100, %v87, 0
    %113 = vmatprep.subr.bf16.mxu0 %v77
    %114 = vmatpush1.bf16.msra.mxu0 %v76
    %115 = vmatprep.subr.bf16.mxu0 %v81
    %116 = vmatpush1.bf16.msra.mxu0 %v80
    %117 = vmatprep.subr.bf16.mxu0 %v105
    %118 = vmatpush1.bf16.msra.mxu0 %v102
    %119 = vmatprep.subr.bf16.mxu0 0
    %120 = vmatpush1.bf16.msra.mxu0 0
    %121 = vmatprep.subr.bf16.mxu0 0
    %122 = vmatpush1.bf16.msra.mxu0 0
    %123 = vmatprep.subr.bf16.mxu0 0
    %124 = vmatpush1.bf16.msra.mxu0 0
    %125 = vmatprep.subr.bf16.mxu0 0
    %126 = vmatpush1.bf16.msra.mxu0 0
    %127 = vmatprep.subr.bf16.mxu0 0
    %128 = vmatpush1.bf16.msra.mxu0 0
    %129 = vmatprep.subr.bf16.mxu0 0
    %130 = vmatpush1.bf16.msra.mxu0 0
    %131 = vmatprep.subr.bf16.mxu0 0
    %132 = vmatpush1.bf16.msra.mxu0 0
    %133 = vmatprep.subr.bf16.mxu0 0
    %134 = vmatpush1.bf16.msra.mxu0 0
    %135 = vmatprep.subr.bf16.mxu0 0
    %136 = vmatpush1.bf16.msra.mxu0 0
    %137 = vmatprep.subr.bf16.mxu0 0
    %138 = vmatpush1.bf16.msra.mxu0 0
    %139 = vmatprep.subr.bf16.mxu0 0
    %140 = vmatpush1.bf16.msra.mxu0 0
    %141 = vmatprep.subr.bf16.mxu0 0
    %142 = vmatpush1.bf16.msra.mxu0 0
    %143 = vmatprep.subr.bf16.mxu0 0
    %144 = vmatpush1.bf16.msra.mxu0 0
    %145 = vmatprep.mubr.bf16.mxu0 0
    %146 = vmatmul.mubr.bf16.gmra.mrb[0].mxu0 %v98
    %v147 = vpop.f32.mrb[0].mxu0
    %v148 = vadd.f32 %v44, %v147
    %v149 = vpop.f32.mrb[0].mxu0
    %v150 = vadd.f32 %v44, %v149
    %v151 = vpop.f32.mrb[0].mxu0
    %v152 = vpop.f32.mrb[0].mxu0
    %153 = vdwg.mxu0
    %154 = vmatprep.subr.bf16.mxu0 %v79
    %155 = vmatpush1.bf16.msra.mxu0 %v78
    %156 = vmatprep.subr.bf16.mxu0 %v83
    %157 = vmatpush1.bf16.msra.mxu0 %v82
    %158 = vmatprep.subr.bf16.mxu0 %v111
    %159 = vmatpush1.bf16.msra.mxu0 %v108
    %160 = vmatprep.subr.bf16.mxu0 0
    %161 = vmatpush1.bf16.msra.mxu0 0
    %162 = vmatprep.subr.bf16.mxu0 0
    %163 = vmatpush1.bf16.msra.mxu0 0
    %164 = vmatprep.subr.bf16.mxu0 0
    %165 = vmatpush1.bf16.msra.mxu0 0
    %166 = vmatprep.subr.bf16.mxu0 0
    %167 = vmatpush1.bf16.msra.mxu0 0
    %168 = vmatprep.subr.bf16.mxu0 0
    %169 = vmatpush1.bf16.msra.mxu0 0
    %170 = vmatprep.subr.bf16.mxu0 0
    %171 = vmatpush1.bf16.msra.mxu0 0
    %172 = vmatprep.subr.bf16.mxu0 0
    %173 = vmatpush1.bf16.msra.mxu0 0
    %174 = vmatprep.subr.bf16.mxu0 0
    %175 = vmatpush1.bf16.msra.mxu0 0
    %176 = vmatprep.subr.bf16.mxu0 0
    %177 = vmatpush1.bf16.msra.mxu0 0
    %178 = vmatprep.subr.bf16.mxu0 0
    %179 = vmatpush1.bf16.msra.mxu0 0
    %180 = vmatprep.subr.bf16.mxu0 0
    %181 = vmatpush1.bf16.msra.mxu0 0
    %182 = vmatprep.subr.bf16.mxu0 0
    %183 = vmatpush1.bf16.msra.mxu0 0
    %184 = vmatprep.subr.bf16.mxu0 0
    %185 = vmatpush1.bf16.msra.mxu0 0
    %186 = vmatprep.mubr.bf16.mxu0 0
    %187 = vmatmul.mubr.bf16.gmra.mrb[0].mxu0 %v98
    %v188 = vpop.f32.mrb[0].mxu0
    %v189 = vadd.f32 %v44, %v188
    %v190 = vpop.f32.mrb[0].mxu0
    %v191 = vadd.f32 %v44, %v190
    %v192 = vpop.f32.mrb[0].mxu0
    %v193 = vpop.f32.mrb[0].mxu0
    %194 = vdwg.mxu0
    %v195 = vmax.f32 %v148, 0.0
    %v196 = vmax.f32 %v150, 0.0
    %v197 = vmax.f32 %v189, 0.0
    %v198 = vmax.f32 %v191, 0.0
    %199 = vxpose.xlu0.b32.start [1/16] %v195, 128
    %200 = vxpose.xlu0.b32.cont [2/16] 0.0, 128
    %201 = vxpose.xlu0.b32.cont [3/16] 0.0, 128
    %202 = vxpose.xlu0.b32.cont [4/16] 0.0, 128
    %203 = vxpose.xlu0.b32.cont [5/16] 0.0, 128
    %204 = vxpose.xlu0.b32.cont [6/16] 0.0, 128
    %205 = vxpose.xlu0.b32.cont [7/16] 0.0, 128
    %206 = vxpose.xlu0.b32.cont [8/16] 0.0, 128
    %207 = vxpose.xlu0.b32.cont [9/16] 0.0, 128
    %208 = vxpose.xlu0.b32.cont [10/16] 0.0, 128
    %209 = vxpose.xlu0.b32.cont [11/16] 0.0, 128
    %210 = vxpose.xlu0.b32.cont [12/16] 0.0, 128
    %211 = vxpose.xlu0.b32.cont [13/16] 0.0, 128
    %212 = vxpose.xlu0.b32.cont [14/16] 0.0, 128
    %213 = vxpose.xlu0.b32.cont [15/16] 0.0, 128
    %214 = vxpose.xlu0.b32.end [16/16] 0.0, 128
    %v215 = vpop.trf.xlu0
    %v216 = vpop.trf.xlu0
    %v217 = vpop.trf.xlu0
    %v218 = vpop.trf.xlu0
    %v219 = vpop.trf.xlu0
    %v220 = vpop.trf.xlu0
    %v221 = vpop.trf.xlu0
    %v222 = vpop.trf.xlu0
    %v223 = vpop.trf.xlu0
    %v224 = vpop.trf.xlu0
    %v225 = vpop.trf.xlu0
    %v226 = vpop.trf.xlu0
    %v227 = vpop.trf.xlu0
    %v228 = vpop.trf.xlu0
    %v229 = vpop.trf.xlu0
    %v230 = vpop.trf.xlu0
    %231 = vxpose.xlu0.b32.start [1/16] %v196, 128
    %232 = vxpose.xlu0.b32.cont [2/16] 0.0, 128
    %233 = vxpose.xlu0.b32.cont [3/16] 0.0, 128
    %234 = vxpose.xlu0.b32.cont [4/16] 0.0, 128
    %235 = vxpose.xlu0.b32.cont [5/16] 0.0, 128
    %236 = vxpose.xlu0.b32.cont [6/16] 0.0, 128
    %237 = vxpose.xlu0.b32.cont [7/16] 0.0, 128
    %238 = vxpose.xlu0.b32.cont [8/16] 0.0, 128
    %239 = vxpose.xlu0.b32.cont [9/16] 0.0, 128
    %240 = vxpose.xlu0.b32.cont [10/16] 0.0, 128
    %241 = vxpose.xlu0.b32.cont [11/16] 0.0, 128
    %242 = vxpose.xlu0.b32.cont [12/16] 0.0, 128
    %243 = vxpose.xlu0.b32.cont [13/16] 0.0, 128
    %244 = vxpose.xlu0.b32.cont [14/16] 0.0, 128
    %245 = vxpose.xlu0.b32.cont [15/16] 0.0, 128
    %246 = vxpose.xlu0.b32.end [16/16] 0.0, 128
    %v247 = vpop.trf.xlu0
    %v248 = vpop.trf.xlu0
    %v249 = vpop.trf.xlu0
    %v250 = vpop.trf.xlu0
    %v251 = vpop.trf.xlu0
    %v252 = vpop.trf.xlu0
    %v253 = vpop.trf.xlu0
    %v254 = vpop.trf.xlu0
    %v255 = vpop.trf.xlu0
    %v256 = vpop.trf.xlu0
    %v257 = vpop.trf.xlu0
    %v258 = vpop.trf.xlu0
    %v259 = vpop.trf.xlu0
    %v260 = vpop.trf.xlu0
    %v261 = vpop.trf.xlu0
    %v262 = vpop.trf.xlu0
    %263 = vxpose.xlu0.b32.start [1/16] %v197, 128
    %264 = vxpose.xlu0.b32.cont [2/16] 0.0, 128
    %265 = vxpose.xlu0.b32.cont [3/16] 0.0, 128
    %266 = vxpose.xlu0.b32.cont [4/16] 0.0, 128
    %267 = vxpose.xlu0.b32.cont [5/16] 0.0, 128
    %268 = vxpose.xlu0.b32.cont [6/16] 0.0, 128
    %269 = vxpose.xlu0.b32.cont [7/16] 0.0, 128
    %270 = vxpose.xlu0.b32.cont [8/16] 0.0, 128
    %271 = vxpose.xlu0.b32.cont [9/16] 0.0, 128
    %272 = vxpose.xlu0.b32.cont [10/16] 0.0, 128
    %273 = vxpose.xlu0.b32.cont [11/16] 0.0, 128
    %274 = vxpose.xlu0.b32.cont [12/16] 0.0, 128
    %275 = vxpose.xlu0.b32.cont [13/16] 0.0, 128
    %276 = vxpose.xlu0.b32.cont [14/16] 0.0, 128
    %277 = vxpose.xlu0.b32.cont [15/16] 0.0, 128
    %278 = vxpose.xlu0.b32.end [16/16] 0.0, 128
    %v279 = vpop.trf.xlu0
    %v280 = vpop.trf.xlu0
    %v281 = vpop.trf.xlu0
    %v282 = vpop.trf.xlu0
    %v283 = vpop.trf.xlu0
    %v284 = vpop.trf.xlu0
    %v285 = vpop.trf.xlu0
    %v286 = vpop.trf.xlu0
    %v287 = vpop.trf.xlu0
    %v288 = vpop.trf.xlu0
    %v289 = vpop.trf.xlu0
    %v290 = vpop.trf.xlu0
    %v291 = vpop.trf.xlu0
    %v292 = vpop.trf.xlu0
    %v293 = vpop.trf.xlu0
    %v294 = vpop.trf.xlu0
    %295 = vxpose.xlu0.b32.start [1/16] %v198, 128
    %296 = vxpose.xlu0.b32.cont [2/16] 0.0, 128
    %297 = vxpose.xlu0.b32.cont [3/16] 0.0, 128
    %298 = vxpose.xlu0.b32.cont [4/16] 0.0, 128
    %299 = vxpose.xlu0.b32.cont [5/16] 0.0, 128
    %300 = vxpose.xlu0.b32.cont [6/16] 0.0, 128
    %301 = vxpose.xlu0.b32.cont [7/16] 0.0, 128
    %302 = vxpose.xlu0.b32.cont [8/16] 0.0, 128
    %303 = vxpose.xlu0.b32.cont [9/16] 0.0, 128
    %304 = vxpose.xlu0.b32.cont [10/16] 0.0, 128
    %305 = vxpose.xlu0.b32.cont [11/16] 0.0, 128
    %306 = vxpose.xlu0.b32.cont [12/16] 0.0, 128
    %307 = vxpose.xlu0.b32.cont [13/16] 0.0, 128
    %308 = vxpose.xlu0.b32.cont [14/16] 0.0, 128
    %309 = vxpose.xlu0.b32.cont [15/16] 0.0, 128
    %310 = vxpose.xlu0.b32.end [16/16] 0.0, 128
    %v311 = vpop.trf.xlu0
    %v312 = vpop.trf.xlu0
    %v313 = vpop.trf.xlu0
    %v314 = vpop.trf.xlu0
    %v315 = vpop.trf.xlu0
    %v316 = vpop.trf.xlu0
    %v317 = vpop.trf.xlu0
    %v318 = vpop.trf.xlu0
    %v319 = vpop.trf.xlu0
    %v320 = vpop.trf.xlu0
    %v321 = vpop.trf.xlu0
    %v322 = vpop.trf.xlu0
    %v323 = vpop.trf.xlu0
    %v324 = vpop.trf.xlu0
    %v325 = vpop.trf.xlu0
    %v326 = vpop.trf.xlu0
    %vm327 = vcmask 64512
    %328 = vst.msk [vmem:[#allocation2] sm:$0xff] %vm327, %v215
    %329 = vst.msk [vmem:[#allocation2 + $0x8] sm:$0xff] %vm327, %v216
    %330 = vst.msk [vmem:[#allocation2 + $0x10] sm:$0xff] %vm327, %v217
    %331 = vst.msk [vmem:[#allocation2 + $0x18] sm:$0xff] %vm327, %v218
    %332 = vst.msk [vmem:[#allocation2 + $0x20] sm:$0xff] %vm327, %v219
    %333 = vst.msk [vmem:[#allocation2 + $0x28] sm:$0xff] %vm327, %v220
    %334 = vst.msk [vmem:[#allocation2 + $0x30] sm:$0xff] %vm327, %v221
    %335 = vst.msk [vmem:[#allocation2 + $0x38] sm:$0xff] %vm327, %v222
    %336 = vst.msk [vmem:[#allocation2 + $0x40] sm:$0xff] %vm327, %v223
    %337 = vst.msk [vmem:[#allocation2 + $0x48] sm:$0xff] %vm327, %v224
    %338 = vst.msk [vmem:[#allocation2 + $0x50] sm:$0xff] %vm327, %v225
    %339 = vst.msk [vmem:[#allocation2 + $0x58] sm:$0xff] %vm327, %v226
    %340 = vst.msk [vmem:[#allocation2 + $0x60] sm:$0xff] %vm327, %v227
    %341 = vst.msk [vmem:[#allocation2 + $0x68] sm:$0xff] %vm327, %v228
    %342 = vst.msk [vmem:[#allocation2 + $0x70] sm:$0xff] %vm327, %v229
    %343 = vst.msk [vmem:[#allocation2 + $0x78] sm:$0xff] %vm327, %v230
    %344 = vst.msk [vmem:[#allocation2 + $0x80] sm:$0xff] %vm327, %v247
    %345 = vst.msk [vmem:[#allocation2 + $0x88] sm:$0xff] %vm327, %v248
    %346 = vst.msk [vmem:[#allocation2 + $0x90] sm:$0xff] %vm327, %v249
    %347 = vst.msk [vmem:[#allocation2 + $0x98] sm:$0xff] %vm327, %v250
    %348 = vst.msk [vmem:[#allocation2 + $0xa0] sm:$0xff] %vm327, %v251
    %349 = vst.msk [vmem:[#allocation2 + $0xa8] sm:$0xff] %vm327, %v252
    %350 = vst.msk [vmem:[#allocation2 + $0xb0] sm:$0xff] %vm327, %v253
    %351 = vst.msk [vmem:[#allocation2 + $0xb8] sm:$0xff] %vm327, %v254
    %352 = vst.msk [vmem:[#allocation2 + $0xc0] sm:$0xff] %vm327, %v255
    %353 = vst.msk [vmem:[#allocation2 + $0xc8] sm:$0xff] %vm327, %v256
    %354 = vst.msk [vmem:[#allocation2 + $0xd0] sm:$0xff] %vm327, %v257
    %355 = vst.msk [vmem:[#allocation2 + $0xd8] sm:$0xff] %vm327, %v258
    %356 = vst.msk [vmem:[#allocation2 + $0xe0] sm:$0xff] %vm327, %v259
    %357 = vst.msk [vmem:[#allocation2 + $0xe8] sm:$0xff] %vm327, %v260
    %358 = vst.msk [vmem:[#allocation2 + $0xf0] sm:$0xff] %vm327, %v261
    %359 = vst.msk [vmem:[#allocation2 + $0xf8] sm:$0xff] %vm327, %v262
    %360 = vst.msk [vmem:[#allocation2 + $0x100] sm:$0xff] %vm327, %v279
    %361 = vst.msk [vmem:[#allocation2 + $0x108] sm:$0xff] %vm327, %v280
    %362 = vst.msk [vmem:[#allocation2 + $0x110] sm:$0xff] %vm327, %v281
    %363 = vst.msk [vmem:[#allocation2 + $0x118] sm:$0xff] %vm327, %v282
    %364 = vst.msk [vmem:[#allocation2 + $0x120] sm:$0xff] %vm327, %v283
    %365 = vst.msk [vmem:[#allocation2 + $0x128] sm:$0xff] %vm327, %v284
    %366 = vst.msk [vmem:[#allocation2 + $0x130] sm:$0xff] %vm327, %v285
    %367 = vst.msk [vmem:[#allocation2 + $0x138] sm:$0xff] %vm327, %v286
    %368 = vst.msk [vmem:[#allocation2 + $0x140] sm:$0xff] %vm327, %v287
    %369 = vst.msk [vmem:[#allocation2 + $0x148] sm:$0xff] %vm327, %v288
    %370 = vst.msk [vmem:[#allocation2 + $0x150] sm:$0xff] %vm327, %v289
    %371 = vst.msk [vmem:[#allocation2 + $0x158] sm:$0xff] %vm327, %v290
    %372 = vst.msk [vmem:[#allocation2 + $0x160] sm:$0xff] %vm327, %v291
    %373 = vst.msk [vmem:[#allocation2 + $0x168] sm:$0xff] %vm327, %v292
    %374 = vst.msk [vmem:[#allocation2 + $0x170] sm:$0xff] %vm327, %v293
    %375 = vst.msk [vmem:[#allocation2 + $0x178] sm:$0xff] %vm327, %v294
    %376 = vst.msk [vmem:[#allocation2 + $0x180] sm:$0xff] %vm327, %v311
    %377 = vst.msk [vmem:[#allocation2 + $0x188] sm:$0xff] %vm327, %v312
    %378 = vst.msk [vmem:[#allocation2 + $0x190] sm:$0xff] %vm327, %v313
    %379 = vst.msk [vmem:[#allocation2 + $0x198] sm:$0xff] %vm327, %v314
    %380 = vst.msk [vmem:[#allocation2 + $0x1a0] sm:$0xff] %vm327, %v315
    %381 = vst.msk [vmem:[#allocation2 + $0x1a8] sm:$0xff] %vm327, %v316
    %382 = vst.msk [vmem:[#allocation2 + $0x1b0] sm:$0xff] %vm327, %v317
    %383 = vst.msk [vmem:[#allocation2 + $0x1b8] sm:$0xff] %vm327, %v318
    %384 = vst.msk [vmem:[#allocation2 + $0x1c0] sm:$0xff] %vm327, %v319
    %385 = vst.msk [vmem:[#allocation2 + $0x1c8] sm:$0xff] %vm327, %v320
    %386 = vst.msk [vmem:[#allocation2 + $0x1d0] sm:$0xff] %vm327, %v321
    %387 = vst.msk [vmem:[#allocation2 + $0x1d8] sm:$0xff] %vm327, %v322
    %388 = vst.msk [vmem:[#allocation2 + $0x1e0] sm:$0xff] %vm327, %v323
    %389 = vst.msk [vmem:[#allocation2 + $0x1e8] sm:$0xff] %vm327, %v324
    %390 = vst.msk [vmem:[#allocation2 + $0x1f0] sm:$0xff] %vm327, %v325
    %391 = vst.msk [vmem:[#allocation2 + $0x1f8] sm:$0xff] %vm327, %v326
    %v392 = vld [vmem:[#allocation2] sm:$0xff]
    %v393 = vld [vmem:[#allocation2 + $0x8] sm:$0xff]
    %v394 = vld [vmem:[#allocation2 + $0x10] sm:$0xff]
    %v395 = vld [vmem:[#allocation2 + $0x18] sm:$0xff]
    %v396 = vld [vmem:[#allocation2 + $0x20] sm:$0xff]
    %v397 = vld [vmem:[#allocation2 + $0x28] sm:$0xff]
    %v398 = vld [vmem:[#allocation2 + $0x30] sm:$0xff]
    %v399 = vld [vmem:[#allocation2 + $0x38] sm:$0xff]
    %v400 = vld [vmem:[#allocation2 + $0x40] sm:$0xff]
    %v401 = vld [vmem:[#allocation2 + $0x48] sm:$0xff]
    %v402 = vld [vmem:[#allocation2 + $0x50] sm:$0xff]
    %v403 = vld [vmem:[#allocation2 + $0x58] sm:$0xff]
    %v404 = vld [vmem:[#allocation2 + $0x60] sm:$0xff]
    %v405 = vld [vmem:[#allocation2 + $0x68] sm:$0xff]
    %v406 = vld [vmem:[#allocation2 + $0x70] sm:$0xff]
    %v407 = vld [vmem:[#allocation2 + $0x78] sm:$0xff]
    %v408 = vld [vmem:[#allocation2 + $0x80] sm:$0xff]
    %v409 = vld [vmem:[#allocation2 + $0x88] sm:$0xff]
    %v410 = vld [vmem:[#allocation2 + $0x90] sm:$0xff]
    %v411 = vld [vmem:[#allocation2 + $0x98] sm:$0xff]
    %v412 = vld [vmem:[#allocation2 + $0xa0] sm:$0xff]
    %v413 = vld [vmem:[#allocation2 + $0xa8] sm:$0xff]
    %v414 = vld [vmem:[#allocation2 + $0xb0] sm:$0xff]
    %v415 = vld [vmem:[#allocation2 + $0xb8] sm:$0xff]
    %v416 = vld [vmem:[#allocation2 + $0xc0] sm:$0xff]
    %v417 = vld [vmem:[#allocation2 + $0xc8] sm:$0xff]
    %v418 = vld [vmem:[#allocation2 + $0xd0] sm:$0xff]
    %v419 = vld [vmem:[#allocation2 + $0xd8] sm:$0xff]
    %v420 = vld [vmem:[#allocation2 + $0xe0] sm:$0xff]
    %v421 = vld [vmem:[#allocation2 + $0xe8] sm:$0xff]
    %v422 = vld [vmem:[#allocation2 + $0xf0] sm:$0xff]
    %v423 = vld [vmem:[#allocation2 + $0xf8] sm:$0xff]
    %v424 = vld [vmem:[#allocation2 + $0x100] sm:$0xff]
    %v425 = vld [vmem:[#allocation2 + $0x108] sm:$0xff]
    %v426 = vld [vmem:[#allocation2 + $0x110] sm:$0xff]
    %v427 = vld [vmem:[#allocation2 + $0x118] sm:$0xff]
    %v428 = vld [vmem:[#allocation2 + $0x120] sm:$0xff]
    %v429 = vld [vmem:[#allocation2 + $0x128] sm:$0xff]
    %v430 = vld [vmem:[#allocation2 + $0x130] sm:$0xff]
    %v431 = vld [vmem:[#allocation2 + $0x138] sm:$0xff]
    %v432 = vld [vmem:[#allocation2 + $0x140] sm:$0xff]
    %v433 = vld [vmem:[#allocation2 + $0x148] sm:$0xff]
    %v434 = vld [vmem:[#allocation2 + $0x150] sm:$0xff]
    %v435 = vld [vmem:[#allocation2 + $0x158] sm:$0xff]
    %v436 = vld [vmem:[#allocation2 + $0x160] sm:$0xff]
    %v437 = vld [vmem:[#allocation2 + $0x168] sm:$0xff]
    %v438 = vld [vmem:[#allocation2 + $0x170] sm:$0xff]
    %v439 = vld [vmem:[#allocation2 + $0x178] sm:$0xff]
    %v440 = vld [vmem:[#allocation2 + $0x180] sm:$0xff]
    %v441 = vld [vmem:[#allocation2 + $0x188] sm:$0xff]
    %v442 = vld [vmem:[#allocation2 + $0x190] sm:$0xff]
    %v443 = vld [vmem:[#allocation2 + $0x198] sm:$0xff]
    %v444 = vld [vmem:[#allocation2 + $0x1a0] sm:$0xff]
    %v445 = vld [vmem:[#allocation2 + $0x1a8] sm:$0xff]
    %v446 = vld [vmem:[#allocation2 + $0x1b0] sm:$0xff]
    %v447 = vld [vmem:[#allocation2 + $0x1b8] sm:$0xff]
    %v448 = vld [vmem:[#allocation2 + $0x1c0] sm:$0xff]
    %v449 = vld [vmem:[#allocation2 + $0x1c8] sm:$0xff]
    %v450 = vld [vmem:[#allocation2 + $0x1d0] sm:$0xff]
    %v451 = vld [vmem:[#allocation2 + $0x1d8] sm:$0xff]
    %v452 = vld [vmem:[#allocation2 + $0x1e0] sm:$0xff]
    %v453 = vld [vmem:[#allocation2 + $0x1e8] sm:$0xff]
    %v454 = vld [vmem:[#allocation2 + $0x1f0] sm:$0xff]
    %v455 = vld [vmem:[#allocation2 + $0x1f8] sm:$0xff]
    %v456 = vmax.f32 %v392, %v394
    %v457 = vmax.f32 %v393, %v395
    %v458 = vmax.f32 %v394, %v396
    %v459 = vmax.f32 %v395, %v397
    %v460 = vmax.f32 %v396, %v398
    %v461 = vmax.f32 %v397, %v399
    %v462 = vmax.f32 %v398, %v400
    %v463 = vmax.f32 %v399, %v401
    %v464 = vmax.f32 %v400, %v402
    %v465 = vmax.f32 %v401, %v403
    %v466 = vmax.f32 %v402, %v404
    %v467 = vmax.f32 %v403, %v405
    %v468 = vmax.f32 %v404, %v406
    %v469 = vmax.f32 %v405, %v407
    %v470 = vmax.f32 %v406, %v408
    %v471 = vmax.f32 %v407, %v409
    %v472 = vmax.f32 %v408, %v410
    %v473 = vmax.f32 %v409, %v411
    %v474 = vmax.f32 %v410, %v412
    %v475 = vmax.f32 %v411, %v413
    %v476 = vmax.f32 %v412, %v414
    %v477 = vmax.f32 %v413, %v415
    %v478 = vmax.f32 %v414, %v416
    %v479 = vmax.f32 %v415, %v417
    %v480 = vmax.f32 %v416, %v418
    %v481 = vmax.f32 %v417, %v419
    %v482 = vmax.f32 %v418, %v420
    %v483 = vmax.f32 %v419, %v421
    %v484 = vmax.f32 %v420, %v422
    %v485 = vmax.f32 %v421, %v423
    %v486 = vmax.f32 %v422, %v424
    %v487 = vmax.f32 %v423, %v425
    %v488 = vmax.f32 %v424, %v426
    %v489 = vmax.f32 %v425, %v427
    %v490 = vmax.f32 %v426, %v428
    %v491 = vmax.f32 %v427, %v429
    %v492 = vmax.f32 %v428, %v430
    %v493 = vmax.f32 %v429, %v431
    %v494 = vmax.f32 %v430, %v432
    %v495 = vmax.f32 %v431, %v433
    %v496 = vmax.f32 %v432, %v434
    %v497 = vmax.f32 %v433, %v435
    %v498 = vmax.f32 %v434, %v436
    %v499 = vmax.f32 %v435, %v437
    %v500 = vmax.f32 %v436, %v438
    %v501 = vmax.f32 %v437, %v439
    %v502 = vmax.f32 %v438, %v440
    %v503 = vmax.f32 %v439, %v441
    %v504 = vmax.f32 %v440, %v442
    %v505 = vmax.f32 %v441, %v443
    %v506 = vmax.f32 %v442, %v444
    %v507 = vmax.f32 %v443, %v445
    %v508 = vmax.f32 %v444, %v446
    %v509 = vmax.f32 %v445, %v447
    %v510 = vmax.f32 %v446, %v448
    %v511 = vmax.f32 %v447, %v449
    %v512 = vmax.f32 %v448, %v450
    %v513 = vmax.f32 %v449, %v451
    %v514 = vmax.f32 %v450, %v452
    %v515 = vmax.f32 %v451, %v453
    %v516 = vmax.f32 %v452, %v454
    %v517 = vmax.f32 %v453, %v455
    %518 = vst.msk [vmem:[#allocation3] sm:$0xff] %vm327, %v456
    %519 = vst.msk [vmem:[#allocation3 + $0x8] sm:$0xff] %vm327, %v457
    %520 = vst.msk [vmem:[#allocation3 + $0x10] sm:$0xff] %vm327, %v458
    %521 = vst.msk [vmem:[#allocation3 + $0x18] sm:$0xff] %vm327, %v459
    %522 = vst.msk [vmem:[#allocation3 + $0x20] sm:$0xff] %vm327, %v460
    %523 = vst.msk [vmem:[#allocation3 + $0x28] sm:$0xff] %vm327, %v461
    %524 = vst.msk [vmem:[#allocation3 + $0x30] sm:$0xff] %vm327, %v462
    %525 = vst.msk [vmem:[#allocation3 + $0x38] sm:$0xff] %vm327, %v463
    %526 = vst.msk [vmem:[#allocation3 + $0x40] sm:$0xff] %vm327, %v464
    %527 = vst.msk [vmem:[#allocation3 + $0x48] sm:$0xff] %vm327, %v465
    %528 = vst.msk [vmem:[#allocation3 + $0x50] sm:$0xff] %vm327, %v466
    %529 = vst.msk [vmem:[#allocation3 + $0x58] sm:$0xff] %vm327, %v467
    %530 = vst.msk [vmem:[#allocation3 + $0x60] sm:$0xff] %vm327, %v468
    %531 = vst.msk [vmem:[#allocation3 + $0x68] sm:$0xff] %vm327, %v469
    %532 = vst.msk [vmem:[#allocation3 + $0x70] sm:$0xff] %vm327, %v470
    %533 = vst.msk [vmem:[#allocation3 + $0x78] sm:$0xff] %vm327, %v471
    %534 = vst.msk [vmem:[#allocation3 + $0x80] sm:$0xff] %vm327, %v472
    %535 = vst.msk [vmem:[#allocation3 + $0x88] sm:$0xff] %vm327, %v473
    %536 = vst.msk [vmem:[#allocation3 + $0x90] sm:$0xff] %vm327, %v474
    %537 = vst.msk [vmem:[#allocation3 + $0x98] sm:$0xff] %vm327, %v475
    %538 = vst.msk [vmem:[#allocation3 + $0xa0] sm:$0xff] %vm327, %v476
    %539 = vst.msk [vmem:[#allocation3 + $0xa8] sm:$0xff] %vm327, %v477
    %540 = vst.msk [vmem:[#allocation3 + $0xb0] sm:$0xff] %vm327, %v478
    %541 = vst.msk [vmem:[#allocation3 + $0xb8] sm:$0xff] %vm327, %v479
    %542 = vst.msk [vmem:[#allocation3 + $0xc0] sm:$0xff] %vm327, %v480
    %543 = vst.msk [vmem:[#allocation3 + $0xc8] sm:$0xff] %vm327, %v481
    %544 = vst.msk [vmem:[#allocation3 + $0xd0] sm:$0xff] %vm327, %v482
    %545 = vst.msk [vmem:[#allocation3 + $0xd8] sm:$0xff] %vm327, %v483
    %546 = vst.msk [vmem:[#allocation3 + $0xe0] sm:$0xff] %vm327, %v484
    %547 = vst.msk [vmem:[#allocation3 + $0xe8] sm:$0xff] %vm327, %v485
    %548 = vst.msk [vmem:[#allocation3 + $0xf0] sm:$0xff] %vm327, %v486
    %549 = vst.msk [vmem:[#allocation3 + $0xf8] sm:$0xff] %vm327, %v487
    %550 = vst.msk [vmem:[#allocation3 + $0x100] sm:$0xff] %vm327, %v488
    %551 = vst.msk [vmem:[#allocation3 + $0x108] sm:$0xff] %vm327, %v489
    %552 = vst.msk [vmem:[#allocation3 + $0x110] sm:$0xff] %vm327, %v490
    %553 = vst.msk [vmem:[#allocation3 + $0x118] sm:$0xff] %vm327, %v491
    %554 = vst.msk [vmem:[#allocation3 + $0x120] sm:$0xff] %vm327, %v492
    %555 = vst.msk [vmem:[#allocation3 + $0x128] sm:$0xff] %vm327, %v493
    %556 = vst.msk [vmem:[#allocation3 + $0x130] sm:$0xff] %vm327, %v494
    %557 = vst.msk [vmem:[#allocation3 + $0x138] sm:$0xff] %vm327, %v495
    %558 = vst.msk [vmem:[#allocation3 + $0x140] sm:$0xff] %vm327, %v496
    %559 = vst.msk [vmem:[#allocation3 + $0x148] sm:$0xff] %vm327, %v497
    %560 = vst.msk [vmem:[#allocation3 + $0x150] sm:$0xff] %vm327, %v498
    %561 = vst.msk [vmem:[#allocation3 + $0x158] sm:$0xff] %vm327, %v499
    %562 = vst.msk [vmem:[#allocation3 + $0x160] sm:$0xff] %vm327, %v500
    %563 = vst.msk [vmem:[#allocation3 + $0x168] sm:$0xff] %vm327, %v501
    %564 = vst.msk [vmem:[#allocation3 + $0x170] sm:$0xff] %vm327, %v502
    %565 = vst.msk [vmem:[#allocation3 + $0x178] sm:$0xff] %vm327, %v503
    %566 = vst.msk [vmem:[#allocation3 + $0x180] sm:$0xff] %vm327, %v504
    %567 = vst.msk [vmem:[#allocation3 + $0x188] sm:$0xff] %vm327, %v505
    %568 = vst.msk [vmem:[#allocation3 + $0x190] sm:$0xff] %vm327, %v506
    %569 = vst.msk [vmem:[#allocation3 + $0x198] sm:$0xff] %vm327, %v507
    %570 = vst.msk [vmem:[#allocation3 + $0x1a0] sm:$0xff] %vm327, %v508
    %571 = vst.msk [vmem:[#allocation3 + $0x1a8] sm:$0xff] %vm327, %v509
    %572 = vst.msk [vmem:[#allocation3 + $0x1b0] sm:$0xff] %vm327, %v510
    %573 = vst.msk [vmem:[#allocation3 + $0x1b8] sm:$0xff] %vm327, %v511
    %574 = vst.msk [vmem:[#allocation3 + $0x1c0] sm:$0xff] %vm327, %v512
    %575 = vst.msk [vmem:[#allocation3 + $0x1c8] sm:$0xff] %vm327, %v513
    %576 = vst.msk [vmem:[#allocation3 + $0x1d0] sm:$0xff] %vm327, %v514
    %577 = vst.msk [vmem:[#allocation3 + $0x1d8] sm:$0xff] %vm327, %v515
    %578 = vst.msk [vmem:[#allocation3 + $0x1e0] sm:$0xff] %vm327, %v516
    %579 = vst.msk [vmem:[#allocation3 + $0x1e8] sm:$0xff] %vm327, %v517
    %v580 = vld [vmem:[#allocation3] ss:$2 sm:$0xff]
    %s581 = scalar_lea.vmem [#allocation3], 1
    %v582 = vld [vmem:[%s581] ss:$2 sm:$0xff]
    %v583 = vmax.f32 %v580, %v582
    %584 = vst.msk [vmem:[%s3] sm:$0xff] %vm327, %v583
    %s585 = scalar_lea.vmem [#allocation3], 32
    %v586 = vld [vmem:[%s585] ss:$2 sm:$0xff]
    %s587 = scalar_lea.vmem [#allocation3], 33
    %v588 = vld [vmem:[%s587] ss:$2 sm:$0xff]
    %v589 = vmax.f32 %v586, %v588
    %590 = vst.msk [vmem:[%s3 + $0x8] sm:$0xff] %vm327, %v589
    %s591 = scalar_lea.vmem [#allocation3], 64
    %v592 = vld [vmem:[%s591] ss:$2 sm:$0xff]
    %s593 = scalar_lea.vmem [#allocation3], 65
    %v594 = vld [vmem:[%s593] ss:$2 sm:$0xff]
    %v595 = vmax.f32 %v592, %v594
    %596 = vst.msk [vmem:[%s3 + $0x10] sm:$0xff] %vm327, %v595
    %s597 = scalar_lea.vmem [#allocation3], 96
    %v598 = vld [vmem:[%s597] ss:$2 sm:$0xff]
    %s599 = scalar_lea.vmem [#allocation3], 97
    %v600 = vld [vmem:[%s599] ss:$2 sm:$0xff]
    %v601 = vmax.f32 %v598, %v600
    %602 = vst.msk [vmem:[%s3 + $0x18] sm:$0xff] %vm327, %v601
    %s603 = scalar_lea.vmem [#allocation3], 128
    %v604 = vld [vmem:[%s603] ss:$2 sm:$0xff]
    %s605 = scalar_lea.vmem [#allocation3], 129
    %v606 = vld [vmem:[%s605] ss:$2 sm:$0xff]
    %v607 = vmax.f32 %v604, %v606
    %608 = vst.msk [vmem:[%s3 + $0x20] sm:$0xff] %vm327, %v607
    %s609 = scalar_lea.vmem [#allocation3], 160
    %v610 = vld [vmem:[%s609] ss:$2 sm:$0xff]
    %s611 = scalar_lea.vmem [#allocation3], 161
    %v612 = vld [vmem:[%s611] ss:$2 sm:$0xff]
    %v613 = vmax.f32 %v610, %v612
    %614 = vst.msk [vmem:[%s3 + $0x28] sm:$0xff] %vm327, %v613
    %s615 = scalar_lea.vmem [#allocation3], 192
    %v616 = vld [vmem:[%s615] ss:$2 sm:$0xff]
    %s617 = scalar_lea.vmem [#allocation3], 193
    %v618 = vld [vmem:[%s617] ss:$2 sm:$0xff]
    %v619 = vmax.f32 %v616, %v618
    %620 = vst.msk [vmem:[%s3 + $0x30] sm:$0xff] %vm327, %v619
    %s621 = scalar_lea.vmem [#allocation3], 224
    %v622 = vld [vmem:[%s621] ss:$2 sm:$0xff]
    %s623 = scalar_lea.vmem [#allocation3], 225
    %v624 = vld [vmem:[%s623] ss:$2 sm:$0xff]
    %v625 = vmax.f32 %v622, %v624
    %626 = vst.msk [vmem:[%s3 + $0x38] sm:$0xff] %vm327, %v625
    %s627 = scalar_lea.vmem [#allocation3], 256
    %v628 = vld [vmem:[%s627] ss:$2 sm:$0xff]
    %s629 = scalar_lea.vmem [#allocation3], 257
    %v630 = vld [vmem:[%s629] ss:$2 sm:$0xff]
    %v631 = vmax.f32 %v628, %v630
    %632 = vst.msk [vmem:[%s3 + $0x40] sm:$0xff] %vm327, %v631
    %s633 = scalar_lea.vmem [#allocation3], 288
    %v634 = vld [vmem:[%s633] ss:$2 sm:$0xff]
    %s635 = scalar_lea.vmem [#allocation3], 289
    %v636 = vld [vmem:[%s635] ss:$2 sm:$0xff]
    %v637 = vmax.f32 %v634, %v636
    %638 = vst.msk [vmem:[%s3 + $0x48] sm:$0xff] %vm327, %v637
    %s639 = scalar_lea.vmem [#allocation3], 320
    %v640 = vld [vmem:[%s639] ss:$2 sm:$0xff]
    %s641 = scalar_lea.vmem [#allocation3], 321
    %v642 = vld [vmem:[%s641] ss:$2 sm:$0xff]
    %v643 = vmax.f32 %v640, %v642
    %644 = vst.msk [vmem:[%s3 + $0x50] sm:$0xff] %vm327, %v643
    %s645 = scalar_lea.vmem [#allocation3], 352
    %v646 = vld [vmem:[%s645] ss:$2 sm:$0xff]
    %s647 = scalar_lea.vmem [#allocation3], 353
    %v648 = vld [vmem:[%s647] ss:$2 sm:$0xff]
    %v649 = vmax.f32 %v646, %v648
    %650 = vst.msk [vmem:[%s3 + $0x58] sm:$0xff] %vm327, %v649
    %s651 = scalar_lea.vmem [#allocation3], 384
    %v652 = vld [vmem:[%s651] ss:$2 sm:$0xff]
    %s653 = scalar_lea.vmem [#allocation3], 385
    %v654 = vld [vmem:[%s653] ss:$2 sm:$0xff]
    %v655 = vmax.f32 %v652, %v654
    %656 = vst.msk [vmem:[%s3 + $0x60] sm:$0xff] %vm327, %v655
    %s657 = scalar_lea.vmem [#allocation3], 416
    %v658 = vld [vmem:[%s657] ss:$2 sm:$0xff]
    %s659 = scalar_lea.vmem [#allocation3], 417
    %v660 = vld [vmem:[%s659] ss:$2 sm:$0xff]
    %v661 = vmax.f32 %v658, %v660
    %662 = vst.msk [vmem:[%s3 + $0x68] sm:$0xff] %vm327, %v661
    %s663 = scalar_lea.vmem [#allocation3], 448
    %v664 = vld [vmem:[%s663] ss:$2 sm:$0xff]
    %s665 = scalar_lea.vmem [#allocation3], 449
    %v666 = vld [vmem:[%s665] ss:$2 sm:$0xff]
    %v667 = vmax.f32 %v664, %v666
    %668 = vst.msk [vmem:[%s3 + $0x70] sm:$0xff] %vm327, %v667
    %s669 = scalar_lea.vmem [#allocation3], 480
    %v670 = vld [vmem:[%s669] ss:$2 sm:$0xff]
    %s671 = scalar_lea.vmem [#allocation3], 481
    %v672 = vld [vmem:[%s671] ss:$2 sm:$0xff]
    %v673 = vmax.f32 %v670, %v672
    %674 = vst.msk [vmem:[%s3 + $0x78] sm:$0xff] %vm327, %v673
    // Predicated region
    $region18: #{tpu_custom_call.1} parent=1 // pred_check
      _
    $region19: #{tpu_custom_call.1} parent=1 // pred_check_branch
      %676 = sbr.rel (0) target = $region21
    $region20: #{tpu_custom_call.1} parent=1 // pred_region
      _
    $region21: #{tpu_custom_call.1} parent=1 // pred_fallthru
      _
    // Predicated region
    $region22: #{tpu_custom_call.1} parent=1 // pred_check
      _
    $region23: #{tpu_custom_call.1} parent=1 // pred_check_branch
      %678 = sbr.rel (0) target = $region25
    $region24: #{tpu_custom_call.1} parent=1 // pred_region
      _
    $region25: #{tpu_custom_call.1} parent=1 // pred_fallthru
      _
    %679 = vsyncpa [#allocation5], 1

</llo_original>
